<compile_context>
chip_gen: v5e
topology: v5e:2x2
jax: 0.10.0
libtpu: 0.0.40
codegen_flags: <defaults>
</compile_context>

<pallas_src>
import math
import functools

import jax
import jax.numpy as jnp
from jax.experimental import pallas as pl
from jax.experimental.pallas import tpu as pltpu


# ----------------------------------------------------------------------------
# Buffer construction (plain JAX) — mirrors nn.Module.__init__
# ----------------------------------------------------------------------------
def make_positional_encoding_table(max_len: int, d_model: int) -> jnp.ndarray:
    position = jnp.arange(max_len, dtype=jnp.float32)[:, None]                    # (max_len, 1)
    div_term = jnp.exp(
        jnp.arange(0, d_model, 2, dtype=jnp.float32) * (-math.log(10000.0) / d_model)
    )                                                                             # (d_model/2,)
    pe = jnp.zeros((max_len, d_model), dtype=jnp.float32)
    pe = pe.at[:, 0::2].set(jnp.sin(position * div_term))
    pe = pe.at[:, 1::2].set(jnp.cos(position * div_term))
    return pe                                                                     # (max_len, d_model)


# ----------------------------------------------------------------------------
# Tile selection: lane-dense blocks of ~2 MiB per x/out buffer so that
# double-buffered x-in + pe-in + out (+ dropout bits) stay well under the
# scoped-VMEM limit on every generation (v5e 16 MiB default, v7x 64 MiB phys).
# ----------------------------------------------------------------------------
_TARGET_BLOCK_BYTES = 2 * 1024 * 1024


def _pick_tile(n: int, multiple: int, max_tile: int) -> int:
    """Largest t <= max_tile with t % multiple == 0 and n % t == 0, else n (full dim)."""
    if n <= max_tile:
        return n
    if n % multiple != 0:
        return n                      # non-aligned dim: use full extent (always legal)
    t = (max_tile // multiple) * multiple
    while t >= multiple:
        if n % t == 0:
            return t
        t -= multiple
    return n


def _pick_tiles(rows: int, lanes: int, itemsize: int):
    l_tile = _pick_tile(lanes, 128, max(128, _TARGET_BLOCK_BYTES // (8 * itemsize)))
    max_rows = max(8, _TARGET_BLOCK_BYTES // (l_tile * itemsize))
    r_tile = _pick_tile(rows, 8, max_rows)
    return r_tile, l_tile


# ----------------------------------------------------------------------------
# Pallas kernels
# ----------------------------------------------------------------------------
def _pe_add_kernel(x_ref, pe_ref, o_ref):
    # x_ref: (r_tile, l_tile), pe_ref: (1, l_tile) — implicit sublane broadcast.
    o_ref[...] = (x_ref[...] + pe_ref[...]).astype(o_ref.dtype)


def _pe_add_dropout_kernel(x_ref, pe_ref, bits_ref, o_ref, *, threshold: int, scale: float):
    # Inverted dropout: keep iff uniform-u32 >= p*2^32, scale kept path by 1/(1-p).
    y = x_ref[...] + pe_ref[...]
    keep = bits_ref[...] >= jnp.uint32(threshold)
    o_ref[...] = jnp.where(keep, y * scale, jnp.zeros_like(y)).astype(o_ref.dtype)


# ----------------------------------------------------------------------------
# Wrapper — equivalent of PositionalEncoding.forward
# ----------------------------------------------------------------------------
def positional_encoding_forward(x, pe, *, dropout_p: float = 0.1,
                                training: bool = False, seed: int = 0):
    """x: (B, S, D); pe: (max_len, D).  training=False => dropout is identity."""
    B, S, D = x.shape
    L = S * D

    # Lane-dense view: merging the two minor dims is a free (contiguous) reshape.
    x2 = x.reshape(B, L)
    # pe[:S] reshaped to (1, S*D); tiny (S*D elems) vs the B*S*D x traffic.
    pe2 = jax.lax.slice(pe, (0, 0), (S, D)).reshape(1, L).astype(x.dtype)

    r_tile, l_tile = _pick_tiles(B, L, jnp.dtype(x.dtype).itemsize)
    grid = (pl.cdiv(B, r_tile), pl.cdiv(L, l_tile))

    x_spec = pl.BlockSpec((r_tile, l_tile), lambda i, j: (i, j))
    pe_spec = pl.BlockSpec((1, l_tile), lambda i, j: (0, j))
    out_spec = pl.BlockSpec((r_tile, l_tile), lambda i, j: (i, j))
    cparams = pltpu.CompilerParams(
        dimension_semantics=("parallel", "parallel"),   # element-wise: shard across TCs
        vmem_limit_bytes=32 * 1024 * 1024,
    )
    out_shape = jax.ShapeDtypeStruct((B, L), x.dtype)

    if (not training) or dropout_p == 0.0:
        out2 = pl.pallas_call(
            _pe_add_kernel,
            out_shape=out_shape,
            grid=grid,
            in_specs=[x_spec, pe_spec],
            out_specs=out_spec,
            compiler_params=cparams,
        )(x2, pe2)
        return out2.reshape(B, S, D)

    # Training mode: Bernoulli(1-p) keep mask with 1/(1-p) scaling (same
    # semantics as nn.Dropout; cannot bit-match torch's RNG stream).
    # TODO(synk): on-chip pltpu.prng_random_bits would avoid streaming the mask
    # bits from HBM, but it has no CPU/interpret lowering, so the bits are
    # drawn host-side with jax.random and fed through the kernel instead.
    bits = jax.random.bits(jax.random.PRNGKey(seed), (B, L), dtype=jnp.uint32)
    threshold = min(int(round(dropout_p * float(2 ** 32))), 2 ** 32 - 1)
    scale = 1.0 / (1.0 - dropout_p)
    kernel = functools.partial(_pe_add_dropout_kernel, threshold=threshold, scale=scale)
    bits_spec = pl.BlockSpec((r_tile, l_tile), lambda i, j: (i, j))

    out2 = pl.pallas_call(
        kernel,
        out_shape=out_shape,
        grid=grid,
        in_specs=[x_spec, pe_spec, bits_spec],
        out_specs=out_spec,
        compiler_params=cparams,
    )(x2, pe2, bits)
    return out2.reshape(B, S, D)


# ----------------------------------------------------------------------------
# Demo / self-check
# ----------------------------------------------------------------------------
if __name__ == "__main__":
    D_MODEL = 32
    MAX_LEN = 1000
    B, S = 2, 8

    key = jax.random.PRNGKey(0)
    x = jax.random.normal(key, (B, S, D_MODEL), dtype=jnp.float32)
    pe = make_positional_encoding_table(MAX_LEN, D_MODEL)

    # Eval-mode forward (dropout == identity): exact reference check.
    out = jax.block_until_ready(
        positional_encoding_forward(x, pe, dropout_p=0.1, training=False)
    )
    ref = x + pe[None, :S, :]
    assert out.shape == (B, S, D_MODEL)
    assert jnp.allclose(out, ref, atol=1e-6, rtol=1e-6), "mismatch vs reference"

    # Training-mode (dropout) kernel: every element is 0 or (x+pe)/(1-p).
    p = 0.1
    out_train = jax.block_until_ready(
        positional_encoding_forward(x, pe, dropout_p=p, training=True, seed=123)
    )
    assert out_train.shape == (B, S, D_MODEL)
    scaled = ref / (1.0 - p)
    ok = jnp.isclose(out_train, 0.0, atol=1e-6) | jnp.isclose(
        out_train, scaled, atol=1e-5, rtol=1e-5
    )
    assert bool(jnp.all(ok)), "dropout output not in {0, (x+pe)/(1-p)}"

    print("KERNEL_OK")
</pallas_src>

<mosaic_0001>
module attributes {stable_mosaic.version = 11 : i64} {
  func.func @_pe_add_kernel(%arg0: i32, %arg1: i32, %arg2: memref<2x256xf32, #tpu.memory_space<vmem>>, %arg3: memref<1x256xf32, #tpu.memory_space<vmem>>, %arg4: memref<2x256xf32, #tpu.memory_space<vmem>>) attributes {dimension_semantics = [#tpu.dimension_semantics<parallel>, #tpu.dimension_semantics<parallel>], iteration_bounds = array<i64: 1, 1>, scalar_prefetch = 0 : i64, scratch_operands = 0 : i64, tpu.core_type = #tpu.core_type<tc>, window_params = [{transform_indices = @transform_0, window_bounds = array<i64: 2, 256>}, {transform_indices = @transform_1, window_bounds = array<i64: 1, 256>}, {transform_indices = @transform_2, window_bounds = array<i64: 2, 256>}]} {
    %c0 = arith.constant 0 : index
    %c0_0 = arith.constant 0 : index
    %0 = vector.load %arg2[%c0, %c0_0] : memref<2x256xf32, #tpu.memory_space<vmem>>, vector<2x256xf32>
    %c0_1 = arith.constant 0 : index
    %c0_2 = arith.constant 0 : index
    %1 = vector.load %arg3[%c0_1, %c0_2] : memref<1x256xf32, #tpu.memory_space<vmem>>, vector<1x256xf32>
    %2 = vector.broadcast %1 : vector<1x256xf32> to vector<2x256xf32>
    %3 = arith.addf %0, %2 : vector<2x256xf32>
    %c0_3 = arith.constant 0 : index
    %c0_4 = arith.constant 0 : index
    %4 = vector.load %arg4[%c0_3, %c0_4] : memref<2x256xf32, #tpu.memory_space<vmem>>, vector<2x256xf32>
    tpu.vector_store %arg4[%c0_3, %c0_4], %3 {strides = array<i32>} : memref<2x256xf32, #tpu.memory_space<vmem>>, vector<2x256xf32>,
    return
  }
  func.func @transform_0(%arg0: i32, %arg1: i32) -> (i32, i32) {
    %c0_i32 = arith.constant 0 : i32
    return %arg0, %arg1 : i32, i32
  }
  func.func @transform_1(%arg0: i32, %arg1: i32) -> (i32, i32) {
    %c0_i32 = arith.constant 0 : i32
    %c0_i32_0 = arith.constant 0 : i32
    return %c0_i32, %arg1 : i32, i32
  }
  func.func @transform_2(%arg0: i32, %arg1: i32) -> (i32, i32) {
    %c0_i32 = arith.constant 0 : i32
    return %arg0, %arg1 : i32, i32
  }
}

</mosaic_0001>

<llo_original>
// kernel: tpu_custom_call.1
$region0: #{tpu_custom_call.1}
  #allocation0 [shape = 'u32[]', space=smem, size = 0x4, offset = 0x4, fixed_abs, tag = 'smem constant byte address 0x4 - core index']
  #allocation1 [shape = 'u32[72,128]{1,0:T(1,128)}', space=vmem, size = 0x9000, scoped, tag = 'internal scratch']
  %s0 = inlined_call_operand.hbm [shape: f32[2,256], index: 0, kind: input, shape index: {}]
  %s1 = inlined_call_operand.hbm [shape: f32[1,256], index: 1, kind: input, shape index: {}]
  %s2 = inlined_call_operand.hbm [shape: f32[2,256], index: 2, kind: output, shape index: {}]
  %s3 = sld [smem:[#allocation0]]
  $region26: #{tpu_custom_call.1} parent=0
    _
  %s5 = ssub.s32 1, %s3
  %s6 = scalar_select 0, %s5, %s3
  $region1: #{tpu_custom_call.1} parent=0
    #allocation2 [shape = 'u8[2048]{0}', space=vmem, size = 0x800, scoped, tag = 'input window, operand 0, single buffered']
    #allocation3 [shape = 's32[1]{0}', space=sflag, size = 0x4, scoped, tag = 'scoped memory for tpu_custom_call.1']
    #allocation4 [shape = 's32[1]{0}', space=sflag, size = 0x4, scoped, tag = 'scoped memory for tpu_custom_call.1']
    #allocation5 [shape = 'u8[1024]{0}', space=vmem, size = 0x400, scoped, tag = 'input window, operand 1, single buffered']
    #allocation6 [shape = 's32[1]{0}', space=sflag, size = 0x4, scoped, tag = 'scoped memory for tpu_custom_call.1']
    #allocation7 [shape = 'u8[2048]{0}', space=vmem, size = 0x800, scoped, tag = 'output window, operand 0, single buffered']
    %7 = vsyncpa [#allocation3], 0
    %8 = vsyncpa [#allocation6], 0
    %9 = vsyncpa [#allocation4], 0
    // Predicated region
    $region2: #{tpu_custom_call.1} parent=1 // pred_check
      _
    $region3: #{tpu_custom_call.1} parent=1 // pred_check_branch
      %11 = sbr.rel (0) target = $region5
    $region4: #{tpu_custom_call.1} parent=1 // pred_region
      %13 = vsyncadd [#allocation3], 0
      %s15 = sshll.u32 %s0, 4
      %s16 = int_to_ptr.hbm [resolvable:$true] %s15
      %s17 = sshll.u32 [#allocation2], 4
      %s18 = int_to_ptr.vmem [resolvable:$true] %s17
      %20 = dma.hbm_to_vmem [thread:$0]  %s16, 64, %s18, [#allocation3]
    $region5: #{tpu_custom_call.1} parent=1 // pred_fallthru
      _
    // Predicated region
    $region6: #{tpu_custom_call.1} parent=1 // pred_check
      _
    $region7: #{tpu_custom_call.1} parent=1 // pred_check_branch
      %22 = sbr.rel (0) target = $region9
    $region8: #{tpu_custom_call.1} parent=1 // pred_region
      %24 = vsyncadd [#allocation6], 0
      %s26 = sshll.u32 %s1, 4
      %s27 = int_to_ptr.hbm [resolvable:$true] %s26
      %s28 = sshll.u32 [#allocation5], 4
      %s29 = int_to_ptr.vmem [resolvable:$true] %s28
      %31 = dma.hbm_to_vmem [thread:$0]  %s27, 32, %s29, [#allocation6]
    $region9: #{tpu_custom_call.1} parent=1 // pred_fallthru
      _
    // Predicated region
    $region10: #{tpu_custom_call.1} parent=1 // pred_check
      _
    $region11: #{tpu_custom_call.1} parent=1 // pred_check_branch
      %33 = sbr.rel (0) target = $region13
    $region12: #{tpu_custom_call.1} parent=1 // pred_region
      %35 = dma.done [#allocation3], 64
    $region13: #{tpu_custom_call.1} parent=1 // pred_fallthru
      _
    // Predicated region
    $region14: #{tpu_custom_call.1} parent=1 // pred_check
      _
    $region15: #{tpu_custom_call.1} parent=1 // pred_check_branch
      %37 = sbr.rel (0) target = $region17
    $region16: #{tpu_custom_call.1} parent=1 // pred_region
      %39 = dma.done [#allocation6], 32
    $region17: #{tpu_custom_call.1} parent=1 // pred_fallthru
      _
    %v40 = vld [vmem:[#allocation2] sm:$0xf]
    %v41 = vld [vmem:[#allocation5] sm:$0x3]
    %v43 = vperm.slane %v41, 0
    %v44 = vperm.slane %v41, 1
    %v45 = vrot.slane %v44, 6
    %vm46 = vcmask 1041408
    %v47 = vsel %vm46, %v43, %v45
    %v49 = vadd.f32 %v40, %v47
    %50 = vst [vmem:[#allocation7] sm:$0xf] %v49
    // Predicated region
    $region18: #{tpu_custom_call.1} parent=1 // pred_check
      _
    $region19: #{tpu_custom_call.1} parent=1 // pred_check_branch
      %52 = sbr.rel (0) target = $region21
    $region20: #{tpu_custom_call.1} parent=1 // pred_region
      %54 = vsyncadd [#allocation4], 0
      %s56 = sshll.u32 [#allocation7], 4
      %s57 = int_to_ptr.vmem [resolvable:$true] %s56
      %s58 = sshll.u32 %s2, 4
      %s59 = int_to_ptr.hbm [resolvable:$true] %s58
      %61 = dma.vmem_to_hbm [thread:$0]  %s57, 64, %s59, [#allocation4]
    $region21: #{tpu_custom_call.1} parent=1 // pred_fallthru
      _
    // Predicated region
    $region22: #{tpu_custom_call.1} parent=1 // pred_check
      _
    $region23: #{tpu_custom_call.1} parent=1 // pred_check_branch
      %63 = sbr.rel (0) target = $region25
    $region24: #{tpu_custom_call.1} parent=1 // pred_region
      %65 = dma.done [#allocation4], 64
    $region25: #{tpu_custom_call.1} parent=1 // pred_fallthru
      _
    %66 = vsyncpa [#allocation3], 1
    %67 = vsyncpa [#allocation6], 1
    %68 = vsyncpa [#allocation4], 1

</llo_original>
